<compile_context>
chip_gen: v7x
topology: tpu7x:2x2x1
jax: 0.10.0
libtpu: 0.0.40
codegen_flags: <defaults>
</compile_context>

<pallas_src>
import jax
import jax.numpy as jnp
import numpy as np
from jax.experimental import pallas as pl
from jax.experimental.pallas import tpu as pltpu

# ----------------------------- synthetic "args" ------------------------------
NUM_WORDS = 64
WORD_EMB_DIM = 16
NUM_FILTERS = 32
WINDOW_SIZE = 3
QUERY_DIM = 16
NUM_CATEGORIES = 12
CAT_EMB_DIM = 16
TITLE_LEN = 8          # multiple of 8 -> tile-aligned in-kernel reshapes
ABSTRACT_LEN = 8
BATCH = 2

NEWS_PATTERN = {
    "title": (0, TITLE_LEN),
    "abstract": (TITLE_LEN, TITLE_LEN + ABSTRACT_LEN),
    "category": (TITLE_LEN + ABSTRACT_LEN, TITLE_LEN + ABSTRACT_LEN + 1),
    "subcategory": (TITLE_LEN + ABSTRACT_LEN + 1, TITLE_LEN + ABSTRACT_LEN + 2),
}

# Rows of the packed (9, BIAS_COLS) f32 bias/query array.
_ROW_T_CONV_B, _ROW_T_ATTN_B, _ROW_T_ATTN_Q = 0, 1, 2
_ROW_A_CONV_B, _ROW_A_ATTN_B, _ROW_A_ATTN_Q = 3, 4, 5
_ROW_ELEM_B, _ROW_F_ATTN_B, _ROW_F_ATTN_Q = 6, 7, 8
BIAS_COLS = 2 * NUM_FILTERS  # 64 >= F and >= Q


def _round_up(x, m):
    return ((x + m - 1) // m) * m


# ------------------------------- fused Pallas kernel ---------------------------
def _news_encoder_kernel(t_x_ref, a_x_ref, e_x_ref,
                         wconv_ref, wattn_ref, wlin_ref, bias_ref, o_ref):
    B = o_ref.shape[0]
    F, Q, W = NUM_FILTERS, QUERY_DIM, WINDOW_SIZE

    def text_field(x_ref, field, r_cb, r_ab, r_aq, seq_len):
        """Conv (one wide matmul) + ReLU + additive attention for one text field."""
        cw = wconv_ref[field]                                    # (E, W*F)  bf16
        aw = wattn_ref[field]                                    # (F, Q)    bf16
        cb = bias_ref[r_cb:r_cb + 1, :F]                         # (1, F)    f32
        ab = bias_ref[r_ab:r_ab + 1, :Q]                         # (1, Q)
        aq = bias_ref[r_aq:r_aq + 1, :Q]                         # (1, Q)

        x = x_ref[...]                                           # (B*SP, E) bf16
        SP = x.shape[0] // B
        S = seq_len

        # Conv2d(1, F, (W, E), padding=((W-1)//2, 0)) as ONE matmul + W shifted
        # chunk adds (chunk w of the columns holds tap w).
        y = jnp.dot(x, cw, preferred_element_type=jnp.float32)   # (B*SP, W*F)
        y3 = y.reshape(B, SP, W * F)                             # SP % 8 == 0 -> aligned
        acc = y3[:, 0:S, 0:F]
        for w in range(1, W):
            # TODO(synk): pltpu.roll on the sublane axis + aligned [:, :S] slice
            # for production S (removes the w-offset slice copies).
            acc = acc + y3[:, w:w + S, w * F:(w + 1) * F]
        h3 = jnp.maximum(acc + cb, 0.0)                          # (B, S, F)  f32
        h2 = h3.reshape(B * S, F)                                # S % 8 == 0 -> aligned

        # Additive attention over S (scores are tanh-bounded -> no "-max" needed).
        t = jnp.tanh(jnp.dot(h2.astype(jnp.bfloat16), aw,
                             preferred_element_type=jnp.float32) + ab)   # (B*S, Q)
        s = jnp.sum(t * aq, axis=-1, keepdims=True).reshape(B, S, 1)
        e = jnp.exp(s)
        a = e * pl.reciprocal(jnp.sum(e, axis=1, keepdims=True), approx=True)
        return jnp.sum(a * h3, axis=1)                           # (B, F)

    v_t = text_field(t_x_ref, 0, _ROW_T_CONV_B, _ROW_T_ATTN_B, _ROW_T_ATTN_Q, TITLE_LEN)
    v_a = text_field(a_x_ref, 1, _ROW_A_CONV_B, _ROW_A_ATTN_B, _ROW_A_ATTN_Q, ABSTRACT_LEN)

    # Category + subcategory element encoders merged into ONE block-diagonal matmul.
    lb = bias_ref[_ROW_ELEM_B:_ROW_ELEM_B + 1, :2 * F]           # (1, 2F)
    ve = jnp.maximum(jnp.dot(e_x_ref[...], wlin_ref[...],
                             preferred_element_type=jnp.float32) + lb, 0.0)   # (B, 2F)
    v_c = ve[:, 0:F]
    v_s = ve[:, F:2 * F]

    # Final additive attention over the 4 field vectors: one projection matmul on
    # the field-major stack, explicit 4-way softmax with an EXACT reciprocal.
    fw = wattn_ref[2]                                            # (F, Q) bf16
    fb = bias_ref[_ROW_F_ATTN_B:_ROW_F_ATTN_B + 1, :Q]
    fq = bias_ref[_ROW_F_ATTN_Q:_ROW_F_ATTN_Q + 1, :Q]
    V = jnp.concatenate([v_t, v_a, v_c, v_s], axis=0)            # (4B, F)
    tproj = jnp.tanh(jnp.dot(V.astype(jnp.bfloat16), fw,
                             preferred_element_type=jnp.float32) + fb)        # (4B, Q)
    esc = jnp.exp(jnp.sum(tproj * fq, axis=-1, keepdims=True))   # (4B, 1)
    e_t, e_a = esc[0:B], esc[B:2 * B]
    e_c, e_s = esc[2 * B:3 * B], esc[3 * B:4 * B]
    num = e_t * v_t + e_a * v_a + e_c * v_c + e_s * v_s          # (B, F)
    o_ref[...] = num / (e_t + e_a + e_c + e_s)


# ------------------------------- wrapper / glue --------------------------------
def news_encoder(params, news):
    """news: (B, L) int32 ids.  Returns (B, NUM_FILTERS) f32."""
    B = news.shape[0]
    F, Q, E, C, W = NUM_FILTERS, QUERY_DIM, WORD_EMB_DIM, CAT_EMB_DIM, WINDOW_SIZE
    pad = (W - 1) // 2

    def text_input(name):
        s0, e0 = NEWS_PATTERN[name]
        S = e0 - s0
        SP = _round_up(S + W - 1, 8)       # sublane-multiple rows per batch element
        emb = jnp.take(params["word_embedding"], news[:, s0:e0], axis=0)   # (B, S, E)
        emb = emb.astype(jnp.bfloat16)
        xp = jnp.pad(emb, ((0, 0), (pad, SP - S - pad), (0, 0)))           # (B, SP, E)
        return xp.reshape(B * SP, E)                                        # (B*SP, E)

    t_x = text_input("title")
    a_x = text_input("abstract")

    cat = jnp.take(params["category_embedding"], news[:, NEWS_PATTERN["category"][0]], axis=0)
    sub = jnp.take(params["category_embedding"], news[:, NEWS_PATTERN["subcategory"][0]], axis=0)
    e_x = jnp.concatenate([cat, sub], axis=-1).astype(jnp.bfloat16)         # (B, 2C)

    def conv_wide(w):   # (W*E, F) -> (E, W*F): column block w holds tap w.
        return w.reshape(W, E, F).transpose(1, 0, 2).reshape(E, W * F)

    wconv = jnp.stack([conv_wide(params["title"]["conv_w"]),
                       conv_wide(params["abstract"]["conv_w"])], axis=0).astype(jnp.bfloat16)
    wattn = jnp.stack([params["title"]["attn_w"], params["abstract"]["attn_w"],
                       params["final"]["attn_w"]], axis=0).astype(jnp.bfloat16)

    wlin = jnp.zeros((2 * C, 2 * F), jnp.float32)
    wlin = wlin.at[:C, :F].set(params["category"]["lin_w"])
    wlin = wlin.at[C:, F:].set(params["subcategory"]["lin_w"]).astype(jnp.bfloat16)

    def brow(v):
        v = jnp.asarray(v, jnp.float32).reshape(-1)
        return jnp.pad(v, (0, BIAS_COLS - v.shape[0]))

    biases = jnp.stack([
        brow(params["title"]["conv_b"]), brow(params["title"]["attn_b"]), brow(params["title"]["attn_q"]),
        brow(params["abstract"]["conv_b"]), brow(params["abstract"]["attn_b"]), brow(params["abstract"]["attn_q"]),
        brow(jnp.concatenate([params["category"]["lin_b"].reshape(-1),
                              params["subcategory"]["lin_b"].reshape(-1)])),
        brow(params["final"]["attn_b"]), brow(params["final"]["attn_q"]),
    ], axis=0)                                                               # (9, 64) f32

    operands = (t_x, a_x, e_x, wconv, wattn, wlin, biases)
    vmem = pl.BlockSpec(memory_space=pltpu.MemorySpace.VMEM)
    return pl.pallas_call(
        _news_encoder_kernel,
        out_shape=jax.ShapeDtypeStruct((B, F), jnp.float32),
        in_specs=[vmem] * len(operands),
        out_specs=vmem,
    )(*operands)


# --------------------------- params / reference check --------------------------
def init_params(key):
    keys = jax.random.split(key, 20)
    p = {}
    we = jax.random.normal(keys[0], (NUM_WORDS, WORD_EMB_DIM), jnp.float32) * 0.1
    p["word_embedding"] = we.at[0].set(0.0)            # padding_idx=0
    ce = jax.random.normal(keys[1], (NUM_CATEGORIES, CAT_EMB_DIM), jnp.float32) * 0.1
    p["category_embedding"] = ce.at[0].set(0.0)        # padding_idx=0
    ki = 2
    for name in ("title", "abstract"):
        p[name] = {
            "conv_w": jax.random.normal(keys[ki], (WINDOW_SIZE * WORD_EMB_DIM, NUM_FILTERS), jnp.float32) * 0.1,
            "conv_b": jax.random.normal(keys[ki + 1], (1, NUM_FILTERS), jnp.float32) * 0.1,
            "attn_w": jax.random.normal(keys[ki + 2], (NUM_FILTERS, QUERY_DIM), jnp.float32) * 0.1,
            "attn_b": jax.random.normal(keys[ki + 3], (1, QUERY_DIM), jnp.float32) * 0.1,
            "attn_q": jax.random.uniform(keys[ki + 4], (1, QUERY_DIM), jnp.float32, -0.1, 0.1),
        }
        ki += 5
    for name in ("category", "subcategory"):
        p[name] = {
            "lin_w": jax.random.normal(keys[ki], (CAT_EMB_DIM, NUM_FILTERS), jnp.float32) * 0.1,
            "lin_b": jax.random.normal(keys[ki + 1], (1, NUM_FILTERS), jnp.float32) * 0.1,
        }
        ki += 2
    p["final"] = {
        "attn_w": jax.random.normal(keys[ki], (NUM_FILTERS, QUERY_DIM), jnp.float32) * 0.1,
        "attn_b": jax.random.normal(keys[ki + 1], (1, QUERY_DIM), jnp.float32) * 0.1,
        "attn_q": jax.random.uniform(keys[ki + 2], (1, QUERY_DIM), jnp.float32, -0.1, 0.1),
    }
    return p


def unfold_windows(x, window, pad):
    """(B, S, E) -> (B, S, window*E), matching Conv2d padding=(pad, 0)."""
    B, S, E = x.shape
    xp = jnp.pad(x, ((0, 0), (pad, pad), (0, 0)))
    s_out = S + 2 * pad - window + 1
    return jnp.concatenate([xp[:, w:w + s_out, :] for w in range(window)], axis=-1)


def _ref_attention(keys, w, b, q, values):
    t = jnp.tanh(keys @ w + b)                   # (B, N, Q)
    s = jnp.sum(t * q, axis=-1)                  # (B, N)
    a = jax.nn.softmax(s, axis=-1)
    return jnp.einsum("bn,bnf->bf", a, values)


def news_encoder_ref(params, news):
    # Mirrors the kernel's bf16 MXU-operand casts (accumulation stays f32).
    bf = lambda x: x.astype(jnp.bfloat16).astype(jnp.float32)
    vecs = []
    for name in ("title", "abstract"):
        s0, e0 = NEWS_PATTERN[name]
        emb = bf(jnp.take(params["word_embedding"], news[:, s0:e0], axis=0))
        pt = params[name]
        x_unf = unfold_windows(emb, WINDOW_SIZE, (WINDOW_SIZE - 1) // 2)
        h = jnp.maximum(jnp.einsum("bsk,kf->bsf", x_unf, bf(pt["conv_w"])) + pt["conv_b"], 0.0)
        vecs.append(_ref_attention(bf(h), bf(pt["attn_w"]), pt["attn_b"], pt["attn_q"], h))
    for name in ("category", "subcategory"):
        s0, _ = NEWS_PATTERN[name]
        emb = bf(jnp.take(params["category_embedding"], news[:, s0], axis=0))
        pe = params[name]
        vecs.append(jnp.maximum(emb @ bf(pe["lin_w"]) + pe["lin_b"], 0.0))
    allv = jnp.stack(vecs, axis=1)                               # (B, 4, F)
    pf = params["final"]
    return _ref_attention(bf(allv), bf(pf["attn_w"]), pf["attn_b"], pf["attn_q"], allv)


# ------------------------------------ main -------------------------------------
if __name__ == "__main__":
    key = jax.random.PRNGKey(0)
    pkey, tkey, ckey = jax.random.split(key, 3)
    params = init_params(pkey)

    total_len = TITLE_LEN + ABSTRACT_LEN + 2
    text_ids = jax.random.randint(tkey, (BATCH, TITLE_LEN + ABSTRACT_LEN), 0, NUM_WORDS, jnp.int32)
    cat_ids = jax.random.randint(ckey, (BATCH, 2), 1, NUM_CATEGORIES, jnp.int32)
    news = jnp.concatenate([text_ids, cat_ids], axis=1)             # (B, total_len)
    assert news.shape == (BATCH, total_len)

    fwd = jax.jit(news_encoder)
    out = fwd(params, news)
    jax.block_until_ready(out)
    assert out.shape == (BATCH, NUM_FILTERS)

    ref = news_encoder_ref(params, news)
    np.testing.assert_allclose(np.asarray(out), np.asarray(ref), rtol=2e-2, atol=5e-3)

    print("KERNEL_OK")
</pallas_src>

<mosaic_0001>
module attributes {stable_mosaic.version = 11 : i64} {
  func.func @_news_encoder_kernel(%arg0: memref<32x16xbf16, #tpu.memory_space<vmem>>, %arg1: memref<32x16xbf16, #tpu.memory_space<vmem>>, %arg2: memref<2x32xbf16, #tpu.memory_space<vmem>>, %arg3: memref<2x16x96xbf16, #tpu.memory_space<vmem>>, %arg4: memref<3x32x16xbf16, #tpu.memory_space<vmem>>, %arg5: memref<32x64xbf16, #tpu.memory_space<vmem>>, %arg6: memref<9x64xf32, #tpu.memory_space<vmem>>, %arg7: memref<2x32xf32, #tpu.memory_space<vmem>>) attributes {dimension_semantics = [], scalar_prefetch = 0 : i64, scratch_operands = 0 : i64, tpu.core_type = #tpu.core_type<tc>} {
    %c0 = arith.constant 0 : index
    %c0_0 = arith.constant 0 : index
    %c0_1 = arith.constant 0 : index
    %0 = vector.load %arg3[%c0, %c0_0, %c0_1] : memref<2x16x96xbf16, #tpu.memory_space<vmem>>, vector<1x16x96xbf16>
    %1 = vector.shape_cast %0 : vector<1x16x96xbf16> to vector<16x96xbf16>
    %c0_2 = arith.constant 0 : index
    %c0_3 = arith.constant 0 : index
    %c0_4 = arith.constant 0 : index
    %2 = vector.load %arg4[%c0_2, %c0_3, %c0_4] : memref<3x32x16xbf16, #tpu.memory_space<vmem>>, vector<1x32x16xbf16>
    %3 = vector.shape_cast %2 : vector<1x32x16xbf16> to vector<32x16xbf16>
    %c0_5 = arith.constant 0 : index
    %c0_6 = arith.constant 0 : index
    %4 = vector.load %arg6[%c0_5, %c0_6] : memref<9x64xf32, #tpu.memory_space<vmem>>, vector<1x32xf32>
    %c1 = arith.constant 1 : index
    %c0_7 = arith.constant 0 : index
    %5 = vector.load %arg6[%c1, %c0_7] : memref<9x64xf32, #tpu.memory_space<vmem>>, vector<1x16xf32>
    %c2 = arith.constant 2 : index
    %c0_8 = arith.constant 0 : index
    %6 = vector.load %arg6[%c2, %c0_8] : memref<9x64xf32, #tpu.memory_space<vmem>>, vector<1x16xf32>
    %c0_9 = arith.constant 0 : index
    %c0_10 = arith.constant 0 : index
    %7 = vector.load %arg0[%c0_9, %c0_10] : memref<32x16xbf16, #tpu.memory_space<vmem>>, vector<32x16xbf16>
    %cst = arith.constant dense<0.000000e+00> : vector<32x96xf32>
    %8 = tpu.matmul %7, %1, %cst {dimension_numbers = #tpu.dot_dimension_numbers<[1], [0], [0], [1], [0, 0, 1, 1], [], []>} : vector<32x16xbf16>, vector<16x96xbf16>, vector<32x96xf32> -> vector<32x96xf32>
    %9 = vector.shape_cast %8 : vector<32x96xf32> to vector<2x16x96xf32>
    %10 = vector.extract_strided_slice %9 {offsets = [0, 0, 0], sizes = [2, 8, 32], strides = [1, 1, 1]} : vector<2x16x96xf32> to vector<2x8x32xf32>
    %11 = vector.extract_strided_slice %9 {offsets = [0, 1, 32], sizes = [2, 8, 32], strides = [1, 1, 1]} : vector<2x16x96xf32> to vector<2x8x32xf32>
    %12 = arith.addf %10, %11 : vector<2x8x32xf32>
    %13 = vector.extract_strided_slice %9 {offsets = [0, 2, 64], sizes = [2, 8, 32], strides = [1, 1, 1]} : vector<2x16x96xf32> to vector<2x8x32xf32>
    %14 = arith.addf %12, %13 : vector<2x8x32xf32>
    %15 = vector.shape_cast %4 : vector<1x32xf32> to vector<1x1x32xf32>
    %16 = vector.broadcast %15 : vector<1x1x32xf32> to vector<2x8x32xf32>
    %17 = arith.addf %14, %16 : vector<2x8x32xf32>
    %cst_11 = arith.constant 0.000000e+00 : f32
    %18 = vector.broadcast %cst_11 : f32 to vector<2x8x32xf32>
    %19 = arith.maximumf %17, %18 : vector<2x8x32xf32>
    %20 = vector.shape_cast %19 : vector<2x8x32xf32> to vector<16x32xf32>
    %21 = arith.truncf %20 : vector<16x32xf32> to vector<16x32xbf16>
    %cst_12 = arith.constant dense<0.000000e+00> : vector<16x16xf32>
    %22 = tpu.matmul %21, %3, %cst_12 {dimension_numbers = #tpu.dot_dimension_numbers<[1], [0], [0], [1], [0, 0, 1, 1], [], []>} : vector<16x32xbf16>, vector<32x16xbf16>, vector<16x16xf32> -> vector<16x16xf32>
    %23 = vector.broadcast %5 : vector<1x16xf32> to vector<16x16xf32>
    %24 = arith.addf %22, %23 : vector<16x16xf32>
    %25 = math.tanh %24 : vector<16x16xf32>
    %26 = vector.broadcast %6 : vector<1x16xf32> to vector<16x16xf32>
    %27 = arith.mulf %25, %26 : vector<16x16xf32>
    %cst_13 = arith.constant dense<0.000000e+00> : vector<16xf32>
    %28 = vector.multi_reduction <add>, %27, %cst_13 [1] : vector<16x16xf32> to vector<16xf32>
    %29 = vector.shape_cast %28 : vector<16xf32> to vector<16x1xf32>
    %30 = vector.shape_cast %29 : vector<16x1xf32> to vector<2x8x1xf32>
    %31 = math.exp %30 : vector<2x8x1xf32>
    %cst_14 = arith.constant dense<0.000000e+00> : vector<2x1xf32>
    %32 = vector.multi_reduction <add>, %31, %cst_14 [1] : vector<2x8x1xf32> to vector<2x1xf32>
    %33 = vector.shape_cast %32 : vector<2x1xf32> to vector<2x1x1xf32>
    %34 = tpu.reciprocal %33 {approx = true} : vector<2x1x1xf32> -> vector<2x1x1xf32>
    %35 = vector.broadcast %34 : vector<2x1x1xf32> to vector<2x8x1xf32>
    %36 = arith.mulf %31, %35 : vector<2x8x1xf32>
    %37 = vector.broadcast %36 : vector<2x8x1xf32> to vector<2x8x32xf32>
    %38 = arith.mulf %37, %19 : vector<2x8x32xf32>
    %cst_15 = arith.constant dense<0.000000e+00> : vector<2x32xf32>
    %39 = vector.multi_reduction <add>, %38, %cst_15 [1] : vector<2x8x32xf32> to vector<2x32xf32>
    %c1_16 = arith.constant 1 : index
    %c0_17 = arith.constant 0 : index
    %c0_18 = arith.constant 0 : index
    %40 = vector.load %arg3[%c1_16, %c0_17, %c0_18] : memref<2x16x96xbf16, #tpu.memory_space<vmem>>, vector<1x16x96xbf16>
    %41 = vector.shape_cast %40 : vector<1x16x96xbf16> to vector<16x96xbf16>
    %c1_19 = arith.constant 1 : index
    %c0_20 = arith.constant 0 : index
    %c0_21 = arith.constant 0 : index
    %42 = vector.load %arg4[%c1_19, %c0_20, %c0_21] : memref<3x32x16xbf16, #tpu.memory_space<vmem>>, vector<1x32x16xbf16>
    %43 = vector.shape_cast %42 : vector<1x32x16xbf16> to vector<32x16xbf16>
    %c3 = arith.constant 3 : index
    %c0_22 = arith.constant 0 : index
    %44 = vector.load %arg6[%c3, %c0_22] : memref<9x64xf32, #tpu.memory_space<vmem>>, vector<1x32xf32>
    %c4 = arith.constant 4 : index
    %c0_23 = arith.constant 0 : index
    %45 = vector.load %arg6[%c4, %c0_23] : memref<9x64xf32, #tpu.memory_space<vmem>>, vector<1x16xf32>
    %c5 = arith.constant 5 : index
    %c0_24 = arith.constant 0 : index
    %46 = vector.load %arg6[%c5, %c0_24] : memref<9x64xf32, #tpu.memory_space<vmem>>, vector<1x16xf32>
    %c0_25 = arith.constant 0 : index
    %c0_26 = arith.constant 0 : index
    %47 = vector.load %arg1[%c0_25, %c0_26] : memref<32x16xbf16, #tpu.memory_space<vmem>>, vector<32x16xbf16>
    %cst_27 = arith.constant dense<0.000000e+00> : vector<32x96xf32>
    %48 = tpu.matmul %47, %41, %cst_27 {dimension_numbers = #tpu.dot_dimension_numbers<[1], [0], [0], [1], [0, 0, 1, 1], [], []>} : vector<32x16xbf16>, vector<16x96xbf16>, vector<32x96xf32> -> vector<32x96xf32>
    %49 = vector.shape_cast %48 : vector<32x96xf32> to vector<2x16x96xf32>
    %50 = vector.extract_strided_slice %49 {offsets = [0, 0, 0], sizes = [2, 8, 32], strides = [1, 1, 1]} : vector<2x16x96xf32> to vector<2x8x32xf32>
    %51 = vector.extract_strided_slice %49 {offsets = [0, 1, 32], sizes = [2, 8, 32], strides = [1, 1, 1]} : vector<2x16x96xf32> to vector<2x8x32xf32>
    %52 = arith.addf %50, %51 : vector<2x8x32xf32>
    %53 = vector.extract_strided_slice %49 {offsets = [0, 2, 64], sizes = [2, 8, 32], strides = [1, 1, 1]} : vector<2x16x96xf32> to vector<2x8x32xf32>
    %54 = arith.addf %52, %53 : vector<2x8x32xf32>
    %55 = vector.shape_cast %44 : vector<1x32xf32> to vector<1x1x32xf32>
    %56 = vector.broadcast %55 : vector<1x1x32xf32> to vector<2x8x32xf32>
    %57 = arith.addf %54, %56 : vector<2x8x32xf32>
    %cst_28 = arith.constant 0.000000e+00 : f32
    %58 = vector.broadcast %cst_28 : f32 to vector<2x8x32xf32>
    %59 = arith.maximumf %57, %58 : vector<2x8x32xf32>
    %60 = vector.shape_cast %59 : vector<2x8x32xf32> to vector<16x32xf32>
    %61 = arith.truncf %60 : vector<16x32xf32> to vector<16x32xbf16>
    %cst_29 = arith.constant dense<0.000000e+00> : vector<16x16xf32>
    %62 = tpu.matmul %61, %43, %cst_29 {dimension_numbers = #tpu.dot_dimension_numbers<[1], [0], [0], [1], [0, 0, 1, 1], [], []>} : vector<16x32xbf16>, vector<32x16xbf16>, vector<16x16xf32> -> vector<16x16xf32>
    %63 = vector.broadcast %45 : vector<1x16xf32> to vector<16x16xf32>
    %64 = arith.addf %62, %63 : vector<16x16xf32>
    %65 = math.tanh %64 : vector<16x16xf32>
    %66 = vector.broadcast %46 : vector<1x16xf32> to vector<16x16xf32>
    %67 = arith.mulf %65, %66 : vector<16x16xf32>
    %cst_30 = arith.constant dense<0.000000e+00> : vector<16xf32>
    %68 = vector.multi_reduction <add>, %67, %cst_30 [1] : vector<16x16xf32> to vector<16xf32>
    %69 = vector.shape_cast %68 : vector<16xf32> to vector<16x1xf32>
    %70 = vector.shape_cast %69 : vector<16x1xf32> to vector<2x8x1xf32>
    %71 = math.exp %70 : vector<2x8x1xf32>
    %cst_31 = arith.constant dense<0.000000e+00> : vector<2x1xf32>
    %72 = vector.multi_reduction <add>, %71, %cst_31 [1] : vector<2x8x1xf32> to vector<2x1xf32>
    %73 = vector.shape_cast %72 : vector<2x1xf32> to vector<2x1x1xf32>
    %74 = tpu.reciprocal %73 {approx = true} : vector<2x1x1xf32> -> vector<2x1x1xf32>
    %75 = vector.broadcast %74 : vector<2x1x1xf32> to vector<2x8x1xf32>
    %76 = arith.mulf %71, %75 : vector<2x8x1xf32>
    %77 = vector.broadcast %76 : vector<2x8x1xf32> to vector<2x8x32xf32>
    %78 = arith.mulf %77, %59 : vector<2x8x32xf32>
    %cst_32 = arith.constant dense<0.000000e+00> : vector<2x32xf32>
    %79 = vector.multi_reduction <add>, %78, %cst_32 [1] : vector<2x8x32xf32> to vector<2x32xf32>
    %c6 = arith.constant 6 : index
    %c0_33 = arith.constant 0 : index
    %80 = vector.load %arg6[%c6, %c0_33] : memref<9x64xf32, #tpu.memory_space<vmem>>, vector<1x64xf32>
    %c0_34 = arith.constant 0 : index
    %c0_35 = arith.constant 0 : index
    %81 = vector.load %arg2[%c0_34, %c0_35] : memref<2x32xbf16, #tpu.memory_space<vmem>>, vector<2x32xbf16>
    %c0_36 = arith.constant 0 : index
    %c0_37 = arith.constant 0 : index
    %82 = vector.load %arg5[%c0_36, %c0_37] : memref<32x64xbf16, #tpu.memory_space<vmem>>, vector<32x64xbf16>
    %cst_38 = arith.constant dense<0.000000e+00> : vector<2x64xf32>
    %83 = tpu.matmul %81, %82, %cst_38 {dimension_numbers = #tpu.dot_dimension_numbers<[1], [0], [0], [1], [0, 0, 1, 1], [], []>} : vector<2x32xbf16>, vector<32x64xbf16>, vector<2x64xf32> -> vector<2x64xf32>
    %84 = vector.broadcast %80 : vector<1x64xf32> to vector<2x64xf32>
    %85 = arith.addf %83, %84 : vector<2x64xf32>
    %cst_39 = arith.constant 0.000000e+00 : f32
    %86 = vector.broadcast %cst_39 : f32 to vector<2x64xf32>
    %87 = arith.maximumf %85, %86 : vector<2x64xf32>
    %88 = vector.extract_strided_slice %87 {offsets = [0, 0], sizes = [2, 32], strides = [1, 1]} : vector<2x64xf32> to vector<2x32xf32>
    %89 = vector.extract_strided_slice %87 {offsets = [0, 32], sizes = [2, 32], strides = [1, 1]} : vector<2x64xf32> to vector<2x32xf32>
    %c2_40 = arith.constant 2 : index
    %c0_41 = arith.constant 0 : index
    %c0_42 = arith.constant 0 : index
    %90 = vector.load %arg4[%c2_40, %c0_41, %c0_42] : memref<3x32x16xbf16, #tpu.memory_space<vmem>>, vector<1x32x16xbf16>
    %91 = vector.shape_cast %90 : vector<1x32x16xbf16> to vector<32x16xbf16>
    %c7 = arith.constant 7 : index
    %c0_43 = arith.constant 0 : index
    %92 = vector.load %arg6[%c7, %c0_43] : memref<9x64xf32, #tpu.memory_space<vmem>>, vector<1x16xf32>
    %c8 = arith.constant 8 : index
    %c0_44 = arith.constant 0 : index
    %93 = vector.load %arg6[%c8, %c0_44] : memref<9x64xf32, #tpu.memory_space<vmem>>, vector<1x16xf32>
    %94 = tpu.concatenate %39, %79, %88, %89 in 0 : vector<2x32xf32>, vector<2x32xf32>, vector<2x32xf32>, vector<2x32xf32> -> vector<8x32xf32>
    %95 = arith.truncf %94 : vector<8x32xf32> to vector<8x32xbf16>
    %cst_45 = arith.constant dense<0.000000e+00> : vector<8x16xf32>
    %96 = tpu.matmul %95, %91, %cst_45 {dimension_numbers = #tpu.dot_dimension_numbers<[1], [0], [0], [1], [0, 0, 1, 1], [], []>} : vector<8x32xbf16>, vector<32x16xbf16>, vector<8x16xf32> -> vector<8x16xf32>
    %97 = vector.broadcast %92 : vector<1x16xf32> to vector<8x16xf32>
    %98 = arith.addf %96, %97 : vector<8x16xf32>
    %99 = math.tanh %98 : vector<8x16xf32>
    %100 = vector.broadcast %93 : vector<1x16xf32> to vector<8x16xf32>
    %101 = arith.mulf %99, %100 : vector<8x16xf32>
    %cst_46 = arith.constant dense<0.000000e+00> : vector<8xf32>
    %102 = vector.multi_reduction <add>, %101, %cst_46 [1] : vector<8x16xf32> to vector<8xf32>
    %103 = vector.shape_cast %102 : vector<8xf32> to vector<8x1xf32>
    %104 = math.exp %103 : vector<8x1xf32>
    %105 = vector.extract_strided_slice %104 {offsets = [0, 0], sizes = [2, 1], strides = [1, 1]} : vector<8x1xf32> to vector<2x1xf32>
    %106 = vector.extract_strided_slice %104 {offsets = [2, 0], sizes = [2, 1], strides = [1, 1]} : vector<8x1xf32> to vector<2x1xf32>
    %107 = vector.extract_strided_slice %104 {offsets = [4, 0], sizes = [2, 1], strides = [1, 1]} : vector<8x1xf32> to vector<2x1xf32>
    %108 = vector.extract_strided_slice %104 {offsets = [6, 0], sizes = [2, 1], strides = [1, 1]} : vector<8x1xf32> to vector<2x1xf32>
    %109 = vector.broadcast %105 : vector<2x1xf32> to vector<2x32xf32>
    %110 = arith.mulf %109, %39 : vector<2x32xf32>
    %111 = vector.broadcast %106 : vector<2x1xf32> to vector<2x32xf32>
    %112 = arith.mulf %111, %79 : vector<2x32xf32>
    %113 = arith.addf %110, %112 : vector<2x32xf32>
    %114 = vector.broadcast %107 : vector<2x1xf32> to vector<2x32xf32>
    %115 = arith.mulf %114, %88 : vector<2x32xf32>
    %116 = arith.addf %113, %115 : vector<2x32xf32>
    %117 = vector.broadcast %108 : vector<2x1xf32> to vector<2x32xf32>
    %118 = arith.mulf %117, %89 : vector<2x32xf32>
    %119 = arith.addf %116, %118 : vector<2x32xf32>
    %120 = arith.addf %105, %106 : vector<2x1xf32>
    %121 = arith.addf %120, %107 : vector<2x1xf32>
    %122 = arith.addf %121, %108 : vector<2x1xf32>
    %123 = vector.broadcast %122 : vector<2x1xf32> to vector<2x32xf32>
    %124 = arith.divf %119, %123 : vector<2x32xf32>
    %c0_47 = arith.constant 0 : index
    %c0_48 = arith.constant 0 : index
    %125 = vector.load %arg7[%c0_47, %c0_48] : memref<2x32xf32, #tpu.memory_space<vmem>>, vector<2x32xf32>
    tpu.vector_store %arg7[%c0_47, %c0_48], %124 {strides = array<i32>} : memref<2x32xf32, #tpu.memory_space<vmem>>, vector<2x32xf32>,
    return
  }
}

</mosaic_0001>

<llo_original>
// kernel: news_encoder.1
$region0: #{news_encoder.1}
  #allocation0 [shape = 'u32[]', space=smem, size = 0x4, offset = 0x4, fixed_abs, tag = 'smem constant byte address 0x4 - core index']
  #allocation1 [shape = 'u32[144,128]{1,0:T(1,128)}', space=vmem, size = 0x12000, scoped, tag = 'internal scratch']
  %s0 = inlined_call_operand.vmem [shape: bf16[32,16], index: 0, kind: input, shape index: {}]
  %s1 = inlined_call_operand.vmem [shape: bf16[32,16], index: 1, kind: input, shape index: {}]
  %s2 = inlined_call_operand.vmem [shape: bf16[2,32], index: 2, kind: input, shape index: {}]
  %s3 = inlined_call_operand.vmem [shape: bf16[2,16,96], index: 3, kind: input, shape index: {}]
  %s4 = inlined_call_operand.vmem [shape: bf16[3,32,16], index: 4, kind: input, shape index: {}]
  %s5 = inlined_call_operand.vmem [shape: bf16[32,64], index: 5, kind: input, shape index: {}]
  %s6 = inlined_call_operand.vmem [shape: f32[9,64], index: 6, kind: input, shape index: {}]
  %s7 = inlined_call_operand.hbm [shape: f32[2,32], index: 7, kind: output, shape index: {}]
  %s8 = sld [smem:[#allocation0]]
  $region38: #{news_encoder.1} parent=0
    _
  %s10 = ssub.s32 1, %s8
  %s11 = scalar_select 0, %s10, %s8
  $region1: #{news_encoder.1} parent=0
    #allocation2 [shape = 'u8[1024]{0}', space=vmem, size = 0x400, scoped, tag = 'output window, operand 0, single buffered']
    #allocation3 [shape = 's32[1]{0}', space=sflag, size = 0x4, scoped, tag = 'scoped memory for news_encoder.1']
    %12 = vsyncpa [#allocation3], 0
    // Predicated region
    $region2: #{news_encoder.1} parent=1 // pred_check
      _
    $region3: #{news_encoder.1} parent=1 // pred_check_branch
      %14 = sbr.rel (0) target = $region5
    $region4: #{news_encoder.1} parent=1 // pred_region
      _
    $region5: #{news_encoder.1} parent=1 // pred_fallthru
      _
    // Predicated region
    $region6: #{news_encoder.1} parent=1 // pred_check
      _
    $region7: #{news_encoder.1} parent=1 // pred_check_branch
      %16 = sbr.rel (0) target = $region9
    $region8: #{news_encoder.1} parent=1 // pred_region
      _
    $region9: #{news_encoder.1} parent=1 // pred_fallthru
      _
    // Predicated region
    $region10: #{news_encoder.1} parent=1 // pred_check
      _
    $region11: #{news_encoder.1} parent=1 // pred_check_branch
      %18 = sbr.rel (0) target = $region13
    $region12: #{news_encoder.1} parent=1 // pred_region
      _
    $region13: #{news_encoder.1} parent=1 // pred_fallthru
      _
    // Predicated region
    $region14: #{news_encoder.1} parent=1 // pred_check
      _
    $region15: #{news_encoder.1} parent=1 // pred_check_branch
      %20 = sbr.rel (0) target = $region17
    $region16: #{news_encoder.1} parent=1 // pred_region
      _
    $region17: #{news_encoder.1} parent=1 // pred_fallthru
      _
    // Predicated region
    $region18: #{news_encoder.1} parent=1 // pred_check
      _
    $region19: #{news_encoder.1} parent=1 // pred_check_branch
      %22 = sbr.rel (0) target = $region21
    $region20: #{news_encoder.1} parent=1 // pred_region
      _
    $region21: #{news_encoder.1} parent=1 // pred_fallthru
      _
    // Predicated region
    $region22: #{news_encoder.1} parent=1 // pred_check
      _
    $region23: #{news_encoder.1} parent=1 // pred_check_branch
      %24 = sbr.rel (0) target = $region25
    $region24: #{news_encoder.1} parent=1 // pred_region
      _
    $region25: #{news_encoder.1} parent=1 // pred_fallthru
      _
    // Predicated region
    $region26: #{news_encoder.1} parent=1 // pred_check
      _
    $region27: #{news_encoder.1} parent=1 // pred_check_branch
      %26 = sbr.rel (0) target = $region29
    $region28: #{news_encoder.1} parent=1 // pred_region
      _
    $region29: #{news_encoder.1} parent=1 // pred_fallthru
      _
    %v28 = vld [vmem:[%s3] sm:$0xf]
    %v29 = vld [vmem:[%s3 + $0x4] sm:$0xf]
    %v30 = vld [vmem:[%s4] sm:$0xf]
    %v31 = vld [vmem:[%s4 + $0x4] sm:$0xf]
    %v32 = vld [vmem:[%s4 + $0x8] sm:$0xf]
    %v33 = vld [vmem:[%s4 + $0xc] sm:$0xf]
    %v34 = vld [vmem:[%s6] sm:$0x1]
    %v35 = vld [vmem:[%s6 + $0x1] sm:$0x1]
    %v36 = vld [vmem:[%s6 + $0x2] sm:$0x1]
    %v37 = vld [vmem:[%s0] sm:$0xf]
    %v38 = vld [vmem:[%s0 + $0x4] sm:$0xf]
    %v39 = vld [vmem:[%s0 + $0x8] sm:$0xf]
    %v40 = vld [vmem:[%s0 + $0xc] sm:$0xf]
    %v45 = vunpack.c.l.b16 %v37
    %v46 = vunpack.c.l.b16 %v38
    %v47 = vunpack.c.l.b16 %v39
    %v48 = vunpack.c.l.b16 %v40
    %v49 = vpack.c.b16 %v46, %v45
    %v50 = vpack.c.b16 %v48, %v47
    %v53 = vunpack.c.l.b16 %v28
    %v54 = vunpack.c.l.b16 %v29
    %v55 = vpack.c.b16 %v54, %v53
    %vm57 = vcmask 130048
    %v59 = vsel %vm57, %v49, 0
    %v62 = vsel %vm57, %v50, 0
    %64 = vmatprep.subr.bf16.mxu0 0
    %65 = vmatpush1.bf16.msra.mxu0 %v55
    %66 = vmatprep.subr.bf16.mxu0 0
    %67 = vmatpush1.bf16.msra.mxu0 0
    %68 = vmatprep.subr.bf16.mxu0 0
    %69 = vmatpush1.bf16.msra.mxu0 0
    %70 = vmatprep.subr.bf16.mxu0 0
    %71 = vmatpush1.bf16.msra.mxu0 0
    %72 = vmatprep.subr.bf16.mxu0 0
    %73 = vmatpush1.bf16.msra.mxu0 0
    %74 = vmatprep.subr.bf16.mxu0 0
    %75 = vmatpush1.bf16.msra.mxu0 0
    %76 = vmatprep.subr.bf16.mxu0 0
    %77 = vmatpush1.bf16.msra.mxu0 0
    %78 = vmatprep.subr.bf16.mxu0 0
    %79 = vmatpush1.bf16.msra.mxu0 0
    %80 = vmatprep.subr.bf16.mxu0 0
    %81 = vmatpush1.bf16.msra.mxu0 0
    %82 = vmatprep.subr.bf16.mxu0 0
    %83 = vmatpush1.bf16.msra.mxu0 0
    %84 = vmatprep.subr.bf16.mxu0 0
    %85 = vmatpush1.bf16.msra.mxu0 0
    %86 = vmatprep.subr.bf16.mxu0 0
    %87 = vmatpush1.bf16.msra.mxu0 0
    %88 = vmatprep.subr.bf16.mxu0 0
    %89 = vmatpush1.bf16.msra.mxu0 0
    %90 = vmatprep.subr.bf16.mxu0 0
    %91 = vmatpush1.bf16.msra.mxu0 0
    %92 = vmatprep.subr.bf16.mxu0 0
    %93 = vmatpush1.bf16.msra.mxu0 0
    %94 = vmatprep.subr.bf16.mxu0 0
    %95 = vmatpush1.bf16.msra.mxu0 0
    %96 = vmatprep.mubr.bf16.mxu0 0
    %97 = vmatmul.mubr.bf16.gmra.mrb[0].mxu0 %v59
    %v98 = vpop.f32.mrb[0].mxu0
    %v99 = vadd.f32 0.0, %v98
    %v100 = vpop.f32.mrb[0].mxu0
    %v101 = vpop.f32.mrb[0].mxu0
    %v102 = vadd.f32 0.0, %v101
    %v103 = vpop.f32.mrb[0].mxu0
    %104 = vmatprep.mubr.bf16.mxu0 0
    %105 = vmatmul.mubr.bf16.gmra.mrb[0].mxu0 %v62
    %v106 = vpop.f32.mrb[0].mxu0
    %v107 = vadd.f32 0.0, %v106
    %v108 = vpop.f32.mrb[0].mxu0
    %v109 = vpop.f32.mrb[0].mxu0
    %v110 = vadd.f32 0.0, %v109
    %v111 = vpop.f32.mrb[0].mxu0
    %112 = vdwg.mxu0
    %vm117 = vcmask 1046528
    %v118 = vrot.slane %v99, 1
    %v119 = vrot.slane %v102, 1
    %v120 = vsel %vm117, %v118, %v119
    %v121 = vrot.slane %v107, 1
    %v122 = vrot.slane %v110, 1
    %v123 = vsel %vm117, %v121, %v122
    %124 = vrot.lane.b32.xlu0 %v120, 96
    %v125 = vpop.permute.xlu0 %124
    %126 = vrot.lane.b32.xlu0 %v123, 96
    %v127 = vpop.permute.xlu0 %126
    %v130 = vadd.f32 %v99, %v125
    %v131 = vadd.f32 %v107, %v127
    %vm132 = vcmask 1045504
    %v133 = vrot.slane %v99, 2
    %v134 = vrot.slane %v102, 2
    %v135 = vsel %vm132, %v133, %v134
    %v136 = vrot.slane %v107, 2
    %v137 = vrot.slane %v110, 2
    %v138 = vsel %vm132, %v136, %v137
    %139 = vrot.lane.b32.xlu0 %v135, 64
    %v140 = vpop.permute.xlu0 %139
    %141 = vrot.lane.b32.xlu0 %v138, 64
    %v142 = vpop.permute.xlu0 %141
    %v145 = vadd.f32 %v130, %v140
    %v146 = vadd.f32 %v131, %v142
    %v147 = vlaneseq
    %v148 = vshrl.u32 %v147, 7
    %v149 = vsub.s32 0, %v148
    %v150 = vrot.slane %v34, %v149
    %v151 = vadd.f32 %v145, %v150
    %v152 = vadd.f32 %v146, %v150
    %v153 = vmax.f32 %v151, 0.0
    %v154 = vmax.f32 %v152, 0.0
    %v155 = vpack.c.bf16 %v154, %v153
    %v156 = vlaneseq
    %v157 = vshrl.u32 %v156, 7
    %v158 = vsub.s32 0, %v157
    %v159 = vrot.slane %v35, %v158
    %v164 = vunpack.c.l.b16 %v30
    %v165 = vunpack.c.l.b16 %v31
    %v166 = vunpack.c.l.b16 %v32
    %v167 = vunpack.c.l.b16 %v33
    %v168 = vpack.c.b16 %v165, %v164
    %v169 = vpack.c.b16 %v167, %v166
    %vm172 = vcmask 261120
    %v174 = vsel %vm172, %v155, 0
    %176 = vmatprep.subr.bf16.mxu0 0
    %177 = vmatpush1.bf16.msra.mxu0 %v168
    %178 = vmatprep.subr.bf16.mxu0 0
    %179 = vmatpush1.bf16.msra.mxu0 %v169
    %180 = vmatprep.subr.bf16.mxu0 0
    %181 = vmatpush1.bf16.msra.mxu0 0
    %182 = vmatprep.subr.bf16.mxu0 0
    %183 = vmatpush1.bf16.msra.mxu0 0
    %184 = vmatprep.subr.bf16.mxu0 0
    %185 = vmatpush1.bf16.msra.mxu0 0
    %186 = vmatprep.subr.bf16.mxu0 0
    %187 = vmatpush1.bf16.msra.mxu0 0
    %188 = vmatprep.subr.bf16.mxu0 0
    %189 = vmatpush1.bf16.msra.mxu0 0
    %190 = vmatprep.subr.bf16.mxu0 0
    %191 = vmatpush1.bf16.msra.mxu0 0
    %192 = vmatprep.subr.bf16.mxu0 0
    %193 = vmatpush1.bf16.msra.mxu0 0
    %194 = vmatprep.subr.bf16.mxu0 0
    %195 = vmatpush1.bf16.msra.mxu0 0
    %196 = vmatprep.subr.bf16.mxu0 0
    %197 = vmatpush1.bf16.msra.mxu0 0
    %198 = vmatprep.subr.bf16.mxu0 0
    %199 = vmatpush1.bf16.msra.mxu0 0
    %200 = vmatprep.subr.bf16.mxu0 0
    %201 = vmatpush1.bf16.msra.mxu0 0
    %202 = vmatprep.subr.bf16.mxu0 0
    %203 = vmatpush1.bf16.msra.mxu0 0
    %204 = vmatprep.subr.bf16.mxu0 0
    %205 = vmatpush1.bf16.msra.mxu0 0
    %206 = vmatprep.subr.bf16.mxu0 0
    %207 = vmatpush1.bf16.msra.mxu0 0
    %208 = vmatprep.mubr.bf16.mxu0 0
    %209 = vmatmul.mubr.bf16.gmra.mrb[0].mxu0 %v174
    %v210 = vpop.f32.mrb[0].mxu0
    %v211 = vadd.f32 %v159, %v210
    %v212 = vpop.f32.mrb[0].mxu0
    %v213 = vpop.f32.mrb[0].mxu0
    %v214 = vadd.f32 %v159, %v213
    %v215 = vpop.f32.mrb[0].mxu0
    %216 = vdwg.mxu0
    %v217 = vtanh.pop %v211
    %v218 = vtanh.pop %v214
    %v219 = vlaneseq
    %v220 = vshrl.u32 %v219, 7
    %v221 = vsub.s32 0, %v220
    %v222 = vrot.slane %v36, %v221
    %v223 = vmul.f32 %v217, %v222
    %v224 = vmul.f32 %v218, %v222
    %v225 = vsel %vm57, %v223, 0.0
    %226 = vadd.xlane.f32.xlu0 %v225
    %v227 = vpop.xlane.xlu0 %226
    %v228 = vsel %vm57, %v224, 0.0
    %229 = vadd.xlane.f32.xlu0 %v228
    %v230 = vpop.xlane.xlu0 %229
    %v231 = vmul.f32 %v227, 1.442695
    %v232 = vpow.pop %v231
    %v233 = vmul.f32 %v230, 1.442695
    %v234 = vpow.pop %v233
    %v235 = vrot.slane %v232, 4
    %v236 = vadd.f32 %v232, %v235
    %v237 = vrot.slane %v236, 2
    %v238 = vadd.f32 %v236, %v237
    %v239 = vrot.slane %v238, 1
    %v240 = vadd.f32 %v238, %v239
    %v241 = vrot.slane %v234, 4
    %v242 = vadd.f32 %v234, %v241
    %v243 = vrot.slane %v242, 2
    %v244 = vadd.f32 %v242, %v243
    %v245 = vrot.slane %v244, 1
    %v246 = vadd.f32 %v244, %v245
    %v247 = vrcp.pop %v240
    %v248 = vrcp.pop %v246
    %v249 = vmul.f32 %v232, %v247
    %v250 = vmul.f32 %v234, %v248
    %v251 = vmul.f32 %v249, %v153
    %v252 = vmul.f32 %v250, %v154
    %v253 = vsel %vm172, %v251, 0.0
    %v254 = vrot.slane %v253, 4
    %v255 = vadd.f32 %v253, %v254
    %v256 = vrot.slane %v255, 2
    %v257 = vadd.f32 %v255, %v256
    %v258 = vrot.slane %v257, 1
    %v259 = vadd.f32 %v257, %v258
    %v260 = vsel %vm172, %v252, 0.0
    %v261 = vrot.slane %v260, 4
    %v262 = vadd.f32 %v260, %v261
    %v263 = vrot.slane %v262, 2
    %v264 = vadd.f32 %v262, %v263
    %v265 = vrot.slane %v264, 1
    %v266 = vadd.f32 %v264, %v265
    %s267 = scalar_lea.vmem %s3, 8
    %v268 = vld [vmem:[%s267] sm:$0xf]
    %v269 = vld [vmem:[%s267 + $0x4] sm:$0xf]
    %s270 = scalar_lea.vmem %s4, 16
    %v271 = vld [vmem:[%s270] sm:$0xf]
    %v272 = vld [vmem:[%s270 + $0x4] sm:$0xf]
    %v273 = vld [vmem:[%s270 + $0x8] sm:$0xf]
    %v274 = vld [vmem:[%s270 + $0xc] sm:$0xf]
    %v275 = vld [vmem:[%s6 + $0x3] sm:$0x1]
    %v276 = vld [vmem:[%s6 + $0x4] sm:$0x1]
    %v277 = vld [vmem:[%s6 + $0x5] sm:$0x1]
    %v278 = vld [vmem:[%s1] sm:$0xf]
    %v279 = vld [vmem:[%s1 + $0x4] sm:$0xf]
    %v280 = vld [vmem:[%s1 + $0x8] sm:$0xf]
    %v281 = vld [vmem:[%s1 + $0xc] sm:$0xf]
    %v286 = vunpack.c.l.b16 %v278
    %v287 = vunpack.c.l.b16 %v279
    %v288 = vunpack.c.l.b16 %v280
    %v289 = vunpack.c.l.b16 %v281
    %v290 = vpack.c.b16 %v287, %v286
    %v291 = vpack.c.b16 %v289, %v288
    %v294 = vunpack.c.l.b16 %v268
    %v295 = vunpack.c.l.b16 %v269
    %v296 = vpack.c.b16 %v295, %v294
    %v299 = vsel %vm57, %v290, 0
    %v302 = vsel %vm57, %v291, 0
    %304 = vmatprep.subr.bf16.mxu0 0
    %305 = vmatpush1.bf16.msra.mxu0 %v296
    %306 = vmatprep.subr.bf16.mxu0 0
    %307 = vmatpush1.bf16.msra.mxu0 0
    %308 = vmatprep.subr.bf16.mxu0 0
    %309 = vmatpush1.bf16.msra.mxu0 0
    %310 = vmatprep.subr.bf16.mxu0 0
    %311 = vmatpush1.bf16.msra.mxu0 0
    %312 = vmatprep.subr.bf16.mxu0 0
    %313 = vmatpush1.bf16.msra.mxu0 0
    %314 = vmatprep.subr.bf16.mxu0 0
    %315 = vmatpush1.bf16.msra.mxu0 0
    %316 = vmatprep.subr.bf16.mxu0 0
    %317 = vmatpush1.bf16.msra.mxu0 0
    %318 = vmatprep.subr.bf16.mxu0 0
    %319 = vmatpush1.bf16.msra.mxu0 0
    %320 = vmatprep.subr.bf16.mxu0 0
    %321 = vmatpush1.bf16.msra.mxu0 0
    %322 = vmatprep.subr.bf16.mxu0 0
    %323 = vmatpush1.bf16.msra.mxu0 0
    %324 = vmatprep.subr.bf16.mxu0 0
    %325 = vmatpush1.bf16.msra.mxu0 0
    %326 = vmatprep.subr.bf16.mxu0 0
    %327 = vmatpush1.bf16.msra.mxu0 0
    %328 = vmatprep.subr.bf16.mxu0 0
    %329 = vmatpush1.bf16.msra.mxu0 0
    %330 = vmatprep.subr.bf16.mxu0 0
    %331 = vmatpush1.bf16.msra.mxu0 0
    %332 = vmatprep.subr.bf16.mxu0 0
    %333 = vmatpush1.bf16.msra.mxu0 0
    %334 = vmatprep.subr.bf16.mxu0 0
    %335 = vmatpush1.bf16.msra.mxu0 0
    %336 = vmatprep.mubr.bf16.mxu0 0
    %337 = vmatmul.mubr.bf16.gmra.mrb[0].mxu0 %v299
    %v338 = vpop.f32.mrb[0].mxu0
    %v339 = vadd.f32 0.0, %v338
    %v340 = vpop.f32.mrb[0].mxu0
    %v341 = vpop.f32.mrb[0].mxu0
    %v342 = vadd.f32 0.0, %v341
    %v343 = vpop.f32.mrb[0].mxu0
    %344 = vmatprep.mubr.bf16.mxu0 0
    %345 = vmatmul.mubr.bf16.gmra.mrb[0].mxu0 %v302
    %v346 = vpop.f32.mrb[0].mxu0
    %v347 = vadd.f32 0.0, %v346
    %v348 = vpop.f32.mrb[0].mxu0
    %v349 = vpop.f32.mrb[0].mxu0
    %v350 = vadd.f32 0.0, %v349
    %v351 = vpop.f32.mrb[0].mxu0
    %352 = vdwg.mxu0
    %v357 = vrot.slane %v339, 1
    %v358 = vrot.slane %v342, 1
    %v359 = vsel %vm117, %v357, %v358
    %v360 = vrot.slane %v347, 1
    %v361 = vrot.slane %v350, 1
    %v362 = vsel %vm117, %v360, %v361
    %363 = vrot.lane.b32.xlu0 %v359, 96
    %v364 = vpop.permute.xlu0 %363
    %365 = vrot.lane.b32.xlu0 %v362, 96
    %v366 = vpop.permute.xlu0 %365
    %v369 = vadd.f32 %v339, %v364
    %v370 = vadd.f32 %v347, %v366
    %v371 = vrot.slane %v339, 2
    %v372 = vrot.slane %v342, 2
    %v373 = vsel %vm132, %v371, %v372
    %v374 = vrot.slane %v347, 2
    %v375 = vrot.slane %v350, 2
    %v376 = vsel %vm132, %v374, %v375
    %377 = vrot.lane.b32.xlu0 %v373, 64
    %v378 = vpop.permute.xlu0 %377
    %379 = vrot.lane.b32.xlu0 %v376, 64
    %v380 = vpop.permute.xlu0 %379
    %v383 = vadd.f32 %v369, %v378
    %v384 = vadd.f32 %v370, %v380
    %v385 = vlaneseq
    %v386 = vshrl.u32 %v385, 7
    %v387 = vsub.s32 0, %v386
    %v388 = vrot.slane %v275, %v387
    %v389 = vadd.f32 %v383, %v388
    %v390 = vadd.f32 %v384, %v388
    %v391 = vmax.f32 %v389, 0.0
    %v392 = vmax.f32 %v390, 0.0
    %v393 = vpack.c.bf16 %v392, %v391
    %v394 = vlaneseq
    %v395 = vshrl.u32 %v394, 7
    %v396 = vsub.s32 0, %v395
    %v397 = vrot.slane %v276, %v396
    %v402 = vunpack.c.l.b16 %v271
    %v403 = vunpack.c.l.b16 %v272
    %v404 = vunpack.c.l.b16 %v273
    %v405 = vunpack.c.l.b16 %v274
    %v406 = vpack.c.b16 %v403, %v402
    %v407 = vpack.c.b16 %v405, %v404
    %v411 = vsel %vm172, %v393, 0
    %413 = vmatprep.subr.bf16.mxu0 0
    %414 = vmatpush1.bf16.msra.mxu0 %v406
    %415 = vmatprep.subr.bf16.mxu0 0
    %416 = vmatpush1.bf16.msra.mxu0 %v407
    %417 = vmatprep.subr.bf16.mxu0 0
    %418 = vmatpush1.bf16.msra.mxu0 0
    %419 = vmatprep.subr.bf16.mxu0 0
    %420 = vmatpush1.bf16.msra.mxu0 0
    %421 = vmatprep.subr.bf16.mxu0 0
    %422 = vmatpush1.bf16.msra.mxu0 0
    %423 = vmatprep.subr.bf16.mxu0 0
    %424 = vmatpush1.bf16.msra.mxu0 0
    %425 = vmatprep.subr.bf16.mxu0 0
    %426 = vmatpush1.bf16.msra.mxu0 0
    %427 = vmatprep.subr.bf16.mxu0 0
    %428 = vmatpush1.bf16.msra.mxu0 0
    %429 = vmatprep.subr.bf16.mxu0 0
    %430 = vmatpush1.bf16.msra.mxu0 0
    %431 = vmatprep.subr.bf16.mxu0 0
    %432 = vmatpush1.bf16.msra.mxu0 0
    %433 = vmatprep.subr.bf16.mxu0 0
    %434 = vmatpush1.bf16.msra.mxu0 0
    %435 = vmatprep.subr.bf16.mxu0 0
    %436 = vmatpush1.bf16.msra.mxu0 0
    %437 = vmatprep.subr.bf16.mxu0 0
    %438 = vmatpush1.bf16.msra.mxu0 0
    %439 = vmatprep.subr.bf16.mxu0 0
    %440 = vmatpush1.bf16.msra.mxu0 0
    %441 = vmatprep.subr.bf16.mxu0 0
    %442 = vmatpush1.bf16.msra.mxu0 0
    %443 = vmatprep.subr.bf16.mxu0 0
    %444 = vmatpush1.bf16.msra.mxu0 0
    %445 = vmatprep.mubr.bf16.mxu0 0
    %446 = vmatmul.mubr.bf16.gmra.mrb[0].mxu0 %v411
    %v447 = vpop.f32.mrb[0].mxu0
    %v448 = vadd.f32 %v397, %v447
    %v449 = vpop.f32.mrb[0].mxu0
    %v450 = vpop.f32.mrb[0].mxu0
    %v451 = vadd.f32 %v397, %v450
    %v452 = vpop.f32.mrb[0].mxu0
    %453 = vdwg.mxu0
    %v454 = vtanh.pop %v448
    %v455 = vtanh.pop %v451
    %v456 = vlaneseq
    %v457 = vshrl.u32 %v456, 7
    %v458 = vsub.s32 0, %v457
    %v459 = vrot.slane %v277, %v458
    %v460 = vmul.f32 %v454, %v459
    %v461 = vmul.f32 %v455, %v459
    %v462 = vsel %vm57, %v460, 0.0
    %463 = vadd.xlane.f32.xlu0 %v462
    %v464 = vpop.xlane.xlu0 %463
    %v465 = vsel %vm57, %v461, 0.0
    %466 = vadd.xlane.f32.xlu0 %v465
    %v467 = vpop.xlane.xlu0 %466
    %v468 = vmul.f32 %v464, 1.442695
    %v469 = vpow.pop %v468
    %v470 = vmul.f32 %v467, 1.442695
    %v471 = vpow.pop %v470
    %v472 = vrot.slane %v469, 4
    %v473 = vadd.f32 %v469, %v472
    %v474 = vrot.slane %v473, 2
    %v475 = vadd.f32 %v473, %v474
    %v476 = vrot.slane %v475, 1
    %v477 = vadd.f32 %v475, %v476
    %v478 = vrot.slane %v471, 4
    %v479 = vadd.f32 %v471, %v478
    %v480 = vrot.slane %v479, 2
    %v481 = vadd.f32 %v479, %v480
    %v482 = vrot.slane %v481, 1
    %v483 = vadd.f32 %v481, %v482
    %v484 = vrcp.pop %v477
    %v485 = vrcp.pop %v483
    %v486 = vmul.f32 %v469, %v484
    %v487 = vmul.f32 %v471, %v485
    %v488 = vmul.f32 %v486, %v391
    %v489 = vmul.f32 %v487, %v392
    %v490 = vsel %vm172, %v488, 0.0
    %v491 = vrot.slane %v490, 4
    %v492 = vadd.f32 %v490, %v491
    %v493 = vrot.slane %v492, 2
    %v494 = vadd.f32 %v492, %v493
    %v495 = vrot.slane %v494, 1
    %v496 = vadd.f32 %v494, %v495
    %v497 = vsel %vm172, %v489, 0.0
    %v498 = vrot.slane %v497, 4
    %v499 = vadd.f32 %v497, %v498
    %v500 = vrot.slane %v499, 2
    %v501 = vadd.f32 %v499, %v500
    %v502 = vrot.slane %v501, 1
    %v503 = vadd.f32 %v501, %v502
    %v504 = vld [vmem:[%s6 + $0x6] sm:$0x1]
    %v505 = vld [vmem:[%s2] sm:$0x1]
    %v506 = vld [vmem:[%s5] sm:$0xf]
    %v507 = vld [vmem:[%s5 + $0x4] sm:$0xf]
    %v508 = vld [vmem:[%s5 + $0x8] sm:$0xf]
    %v509 = vld [vmem:[%s5 + $0xc] sm:$0xf]
    %v510 = vlaneseq
    %v511 = vshrl.u32 %v510, 7
    %v512 = vsub.s32 0, %v511
    %v513 = vrot.slane %v504, %v512
    %v518 = vunpack.c.l.b16 %v506
    %v519 = vunpack.c.l.b16 %v507
    %v520 = vunpack.c.l.b16 %v508
    %v521 = vunpack.c.l.b16 %v509
    %v522 = vpack.c.b16 %v519, %v518
    %v523 = vpack.c.b16 %v521, %v520
    %v527 = vsel %vm172, %v505, 0
    %529 = vmatprep.subr.bf16.mxu0 0
    %530 = vmatpush1.bf16.msra.mxu0 %v522
    %531 = vmatprep.subr.bf16.mxu0 0
    %532 = vmatpush1.bf16.msra.mxu0 %v523
    %533 = vmatprep.subr.bf16.mxu0 0
    %534 = vmatpush1.bf16.msra.mxu0 0
    %535 = vmatprep.subr.bf16.mxu0 0
    %536 = vmatpush1.bf16.msra.mxu0 0
    %537 = vmatprep.subr.bf16.mxu0 0
    %538 = vmatpush1.bf16.msra.mxu0 0
    %539 = vmatprep.subr.bf16.mxu0 0
    %540 = vmatpush1.bf16.msra.mxu0 0
    %541 = vmatprep.subr.bf16.mxu0 0
    %542 = vmatpush1.bf16.msra.mxu0 0
    %543 = vmatprep.subr.bf16.mxu0 0
    %544 = vmatpush1.bf16.msra.mxu0 0
    %545 = vmatprep.subr.bf16.mxu0 0
    %546 = vmatpush1.bf16.msra.mxu0 0
    %547 = vmatprep.subr.bf16.mxu0 0
    %548 = vmatpush1.bf16.msra.mxu0 0
    %549 = vmatprep.subr.bf16.mxu0 0
    %550 = vmatpush1.bf16.msra.mxu0 0
    %551 = vmatprep.subr.bf16.mxu0 0
    %552 = vmatpush1.bf16.msra.mxu0 0
    %553 = vmatprep.subr.bf16.mxu0 0
    %554 = vmatpush1.bf16.msra.mxu0 0
    %555 = vmatprep.subr.bf16.mxu0 0
    %556 = vmatpush1.bf16.msra.mxu0 0
    %557 = vmatprep.subr.bf16.mxu0 0
    %558 = vmatpush1.bf16.msra.mxu0 0
    %559 = vmatprep.subr.bf16.mxu0 0
    %560 = vmatpush1.bf16.msra.mxu0 0
    %561 = vmatprep.mubr.bf16.mxu0 0
    %562 = vmatmul.mubr.bf16.gmra.mrb[0].mxu0 %v527
    %v563 = vpop.f32.mrb[0].mxu0
    %v564 = vadd.f32 %v513, %v563
    %v565 = vpop.f32.mrb[0].mxu0
    %v566 = vpop.f32.mrb[0].mxu0
    %v567 = vpop.f32.mrb[0].mxu0
    %568 = vdwg.mxu0
    %v569 = vmax.f32 %v564, 0.0
    %s570 = scalar_lea.vmem %s4, 32
    %v571 = vld [vmem:[%s570] sm:$0xf]
    %v572 = vld [vmem:[%s570 + $0x4] sm:$0xf]
    %v573 = vld [vmem:[%s570 + $0x8] sm:$0xf]
    %v574 = vld [vmem:[%s570 + $0xc] sm:$0xf]
    %v575 = vld [vmem:[%s6 + $0x7] sm:$0x1]
    %v576 = vld [vmem:[%s6 + $0x8] sm:$0x1]
    %vm579 = vcmask 1041409
    %v580 = vsel %vm579, %v266, %v259
    %vm584 = vcmask 1043459
    %v585 = vsel %vm584, %v503, %v496
    %v588 = vrot.slane %v569, 4
    %v590 = vrot.slane %v569, 2
    %591 = vrot.lane.b32.xlu0 %v590, 96
    %v592 = vpop.permute.xlu0 %591
    %vm594 = vcmask 1041408
    %v595 = vsel %vm594, %v580, %v585
    %vm596 = vcmask 1043456
    %v597 = vsel %vm596, %v595, %v588
    %v598 = vsel %vm132, %v597, %v592
    %v599 = vpack.c.bf16 %v598, %v598
    %v600 = vlaneseq
    %v601 = vshrl.u32 %v600, 7
    %v602 = vsub.s32 0, %v601
    %v603 = vrot.slane %v575, %v602
    %v608 = vunpack.c.l.b16 %v571
    %v609 = vunpack.c.l.b16 %v572
    %v610 = vunpack.c.l.b16 %v573
    %v611 = vunpack.c.l.b16 %v574
    %v612 = vpack.c.b16 %v609, %v608
    %v613 = vpack.c.b16 %v611, %v610
    %v617 = vsel %vm172, %v599, 0
    %619 = vmatprep.subr.bf16.mxu0 0
    %620 = vmatpush1.bf16.msra.mxu0 %v612
    %621 = vmatprep.subr.bf16.mxu0 0
    %622 = vmatpush1.bf16.msra.mxu0 %v613
    %623 = vmatprep.subr.bf16.mxu0 0
    %624 = vmatpush1.bf16.msra.mxu0 0
    %625 = vmatprep.subr.bf16.mxu0 0
    %626 = vmatpush1.bf16.msra.mxu0 0
    %627 = vmatprep.subr.bf16.mxu0 0
    %628 = vmatpush1.bf16.msra.mxu0 0
    %629 = vmatprep.subr.bf16.mxu0 0
    %630 = vmatpush1.bf16.msra.mxu0 0
    %631 = vmatprep.subr.bf16.mxu0 0
    %632 = vmatpush1.bf16.msra.mxu0 0
    %633 = vmatprep.subr.bf16.mxu0 0
    %634 = vmatpush1.bf16.msra.mxu0 0
    %635 = vmatprep.subr.bf16.mxu0 0
    %636 = vmatpush1.bf16.msra.mxu0 0
    %637 = vmatprep.subr.bf16.mxu0 0
    %638 = vmatpush1.bf16.msra.mxu0 0
    %639 = vmatprep.subr.bf16.mxu0 0
    %640 = vmatpush1.bf16.msra.mxu0 0
    %641 = vmatprep.subr.bf16.mxu0 0
    %642 = vmatpush1.bf16.msra.mxu0 0
    %643 = vmatprep.subr.bf16.mxu0 0
    %644 = vmatpush1.bf16.msra.mxu0 0
    %645 = vmatprep.subr.bf16.mxu0 0
    %646 = vmatpush1.bf16.msra.mxu0 0
    %647 = vmatprep.subr.bf16.mxu0 0
    %648 = vmatpush1.bf16.msra.mxu0 0
    %649 = vmatprep.subr.bf16.mxu0 0
    %650 = vmatpush1.bf16.msra.mxu0 0
    %651 = vmatprep.mubr.bf16.mxu0 0
    %652 = vmatmul.mubr.bf16.gmra.mrb[0].mxu0 %v617
    %v653 = vpop.f32.mrb[0].mxu0
    %v654 = vadd.f32 %v603, %v653
    %v655 = vpop.f32.mrb[0].mxu0
    %v656 = vpop.f32.mrb[0].mxu0
    %v657 = vpop.f32.mrb[0].mxu0
    %658 = vdwg.mxu0
    %v659 = vtanh.pop %v654
    %v660 = vlaneseq
    %v661 = vshrl.u32 %v660, 7
    %v662 = vsub.s32 0, %v661
    %v663 = vrot.slane %v576, %v662
    %v664 = vmul.f32 %v659, %v663
    %v665 = vsel %vm57, %v664, 0.0
    %666 = vadd.xlane.f32.xlu0 %v665
    %v667 = vpop.xlane.xlu0 %666
    %v668 = vmul.f32 %v667, 1.442695
    %v669 = vpow.pop %v668
    %v670 = vmul.f32 %v669, %v580
    %v671 = vmul.f32 %v669, %v585
    %v673 = vrot.slane %v671, 2
    %v675 = vadd.f32 %v670, %v673
    %v676 = vmul.f32 %v669, %v588
    %v678 = vrot.slane %v676, 4
    %v680 = vadd.f32 %v675, %v678
    %v681 = vmul.f32 %v669, %v592
    %v683 = vrot.slane %v681, 6
    %v685 = vadd.f32 %v680, %v683
    %v687 = vrot.slane %v669, 2
    %v689 = vadd.f32 %v669, %v687
    %v690 = vrot.slane %v669, 4
    %v692 = vadd.f32 %v689, %v690
    %v693 = vrot.slane %v669, 6
    %v695 = vadd.f32 %v692, %v693
    %697 = vset.pattern.permute.xlu0 0
    %698 = vperm.xlu0 %697, %v695
    %v699 = vpop.permute.xlu0 %698
    %v701 = vrcp.pop %v699
    %v702 = vmul.f32 %v685, %v701
    %vm703 = vcmask 254976
    %704 = vst.msk [vmem:[#allocation2] sm:$0x3] %vm703, %v702
    // Predicated region
    $region30: #{news_encoder.1} parent=1 // pred_check
      _
    $region31: #{news_encoder.1} parent=1 // pred_check_branch
      %706 = sbr.rel (0) target = $region33
    $region32: #{news_encoder.1} parent=1 // pred_region
      %s708 = ssub.s32 32, 32
      %709 = vsyncadd [#allocation3], %s708
      %s711 = sshll.u32 [#allocation2], 4
      %s712 = int_to_ptr.vmem [resolvable:$true] %s711
      %714 = dma.vmem_to_hbm [thread:$0]  %s712, 32, %s7, [#allocation3]
    $region33: #{news_encoder.1} parent=1 // pred_fallthru
      _
    // Predicated region
    $region34: #{news_encoder.1} parent=1 // pred_check
      _
    $region35: #{news_encoder.1} parent=1 // pred_check_branch
      %716 = sbr.rel (0) target = $region37
    $region36: #{news_encoder.1} parent=1 // pred_region
      %717 = dma.done [#allocation3], 32
    $region37: #{news_encoder.1} parent=1 // pred_fallthru
      _
    %718 = vsyncpa [#allocation3], 1

</llo_original>
